<compile_context>
chip_gen: v6e
topology: v6e:2x2x1
jax: 0.10.0
libtpu: 0.0.40
codegen_flags: <defaults>
</compile_context>

<pallas_src>
import functools

import jax
import jax.numpy as jnp
from jax.experimental import pallas as pl
from jax.experimental.pallas import tpu as pltpu

# ------------------- synthetic "Run" configuration -------------------
INPUT_SHAPE = 32          # run.network_config.input_shape
OUTPUT_SHAPE = 8          # run.network_config.output_shape
SUB_ACTION_COUNT = 2      # run.agent_config.sub_action_count
SUB_ACTION_SIZE = OUTPUT_SHAPE // SUB_ACTION_COUNT   # A = 4
HIDDEN = 128              # config['shapes'] = [128, 128]
OUTPUT_MAX_VALUE = 2.0    # run.network_config.output_max_value
A_PAD = 8                 # sublane-padded head rows (kernel writes mean^T [A_PAD, TB])
MAX_BATCH_TILE = 2048     # lane-tile cap; ~3 MB/step of VMEM, << 32 MiB scoped limit
GRID_MIN_BATCH = 256      # below this, skip the grid entirely (latency-bound regime)
# run.network_config.activation_class is unspecified in-script; we use Tanh.
# TODO(synk): swap jnp.tanh for the actual activation_class if it differs.


def _round_up(n, m):
    return ((n + m - 1) // m) * m


def _cdiv(a, b):
    return -(-a // b)


# ------------------------- Pallas kernel ------------------------------
def _actor_kernel(x_ref, w1_ref, b1_ref, w2_ref, b2_ref, w3t_ref, b3t_ref,
                  mean_t_ref, *, output_max):
    """Fused 3-layer MLP + tanh scaling for one batch tile.

    x_ref:      [TB, D_in]
    w1/b1:      [D_in, H], [1, H]
    w2/b2:      [H, H],    [1, H]
    w3t/b3t:    [A_PAD, H], [A_PAD, 1]   (head transposed; rows >= A are zero)
    mean_t_ref: [A_PAD, TB]              (mean^T; batch on lanes -> lane-dense store)
    """
    x = x_ref[...]

    # hidden layer 1 (MXU matmul, f32 accumulation; tanh on EUP)
    h = jnp.tanh(jnp.dot(x, w1_ref[...], preferred_element_type=jnp.float32)
                 + b1_ref[...])
    # hidden layer 2
    h = jnp.tanh(jnp.dot(h, w2_ref[...], preferred_element_type=jnp.float32)
                 + b2_ref[...])
    # output head computed transposed: out^T[a, b] = sum_k w3t[a, k] * h[b, k]
    # (NT matmul; same dimension numbers as flash-attention's q @ k^T)
    out_t = jax.lax.dot_general(
        w3t_ref[...], h, (((1,), (1,)), ((), ())),
        preferred_element_type=jnp.float32)
    # final_activation = None; mean = output_max * tanh(out).  Only A_PAD rows here
    # (vs. 128 padded lanes before), so keeping the tanh in-kernel is cheap.
    mean_t_ref[...] = output_max * jnp.tanh(out_t + b3t_ref[...])


# ------------------------------ wrapper --------------------------------
def actor_forward(x, params, actor_logstd, module_index, *,
                  output_max=OUTPUT_MAX_VALUE):
    """Actor forward for a static (Python int) module_index.

    params: list of per-sub-action dicts with keys w1,b1,w2,b2,w3t,b3t.
    actor_logstd: [OUTPUT_SHAPE] parameter vector.
    Returns (mean [B, A], std [B, A]) with A = SUB_ACTION_SIZE.
    """
    p = params[module_index]
    B = x.shape[0]
    A = SUB_ACTION_SIZE
    kernel = functools.partial(_actor_kernel, output_max=output_max)

    if B < GRID_MIN_BATCH:
        # Tiny/medium batch: one invocation, no grid -> whole operands in VMEM,
        # no pipeline / grid-step bookkeeping.  (v7x's second TensorCore idles
        # here, but this regime is launch/DMA latency-bound, not throughput-bound.)
        B_pad = _round_up(B, 8)                      # sublane-align the matmul M dim
        xp = jnp.pad(x, ((0, B_pad - B), (0, 0))) if B_pad != B else x
        mean_t = pl.pallas_call(
            kernel,
            out_shape=jax.ShapeDtypeStruct((A_PAD, B_pad), jnp.float32),
        )(xp, p["w1"], p["b1"], p["w2"], p["b2"], p["w3t"], p["b3t"])
    else:
        # Large batch: lane-dense batch tiles (tb multiple of 128), at least 2 tiles
        # so the "parallel" axis shards across both v7x TensorCores (no-op on v5e/v6e).
        tb = min(MAX_BATCH_TILE, _round_up(_cdiv(B, 2), 128))
        B_pad = _round_up(B, tb)
        xp = jnp.pad(x, ((0, B_pad - B), (0, 0))) if B_pad != B else x
        grid = (B_pad // tb,)

        flops = 2 * B_pad * (INPUT_SHAPE * HIDDEN + HIDDEN * HIDDEN
                             + HIDDEN * A_PAD)
        transcendentals = B_pad * (2 * HIDDEN + A_PAD)
        bytes_accessed = 4 * (B_pad * INPUT_SHAPE + A_PAD * B_pad
                              + INPUT_SHAPE * HIDDEN + HIDDEN * HIDDEN
                              + A_PAD * HIDDEN + 2 * HIDDEN + A_PAD)

        mean_t = pl.pallas_call(
            kernel,
            out_shape=jax.ShapeDtypeStruct((A_PAD, B_pad), jnp.float32),
            grid=grid,
            in_specs=[
                pl.BlockSpec((tb, INPUT_SHAPE), lambda i: (i, 0)),       # x: per-tile
                pl.BlockSpec((INPUT_SHAPE, HIDDEN), lambda i: (0, 0)),   # weights stay
                pl.BlockSpec((1, HIDDEN), lambda i: (0, 0)),             # resident:
                pl.BlockSpec((HIDDEN, HIDDEN), lambda i: (0, 0)),        # same block
                pl.BlockSpec((1, HIDDEN), lambda i: (0, 0)),             # index for
                pl.BlockSpec((A_PAD, HIDDEN), lambda i: (0, 0)),         # every tile
                pl.BlockSpec((A_PAD, 1), lambda i: (0, 0)),
            ],
            out_specs=pl.BlockSpec((A_PAD, tb), lambda i: (0, i)),
            compiler_params=pltpu.CompilerParams(
                dimension_semantics=("parallel",)),
            cost_estimate=pl.CostEstimate(flops=flops,
                                          transcendentals=transcendentals,
                                          bytes_accessed=bytes_accessed),
        )(xp, p["w1"], p["b1"], p["w2"], p["b2"], p["w3t"], p["b3t"])

    # mean^T [A_PAD, *] -> mean [B, A]; slice + transpose touches only ~A*B floats.
    mean = mean_t[:A, :B].T

    # std = exp(logstd_slice) broadcast over batch: independent of x, so it stays
    # in the wrapper (no per-row HBM writeback from the kernel).
    logstd_slice = actor_logstd[module_index * A:(module_index + 1) * A]
    std = jnp.broadcast_to(jnp.exp(logstd_slice)[None, :], (B, A))
    return mean, std


# --------------------- deterministic parameter init -------------------
def _init_linear(key, fan_in, fan_out):
    # PyTorch nn.Linear default: U(-1/sqrt(fan_in), 1/sqrt(fan_in)) for W and b
    kw, kb = jax.random.split(key)
    bound = 1.0 / jnp.sqrt(fan_in)
    w = jax.random.uniform(kw, (fan_in, fan_out), jnp.float32, -bound, bound)
    b = jax.random.uniform(kb, (1, fan_out), jnp.float32, -bound, bound)
    return w, b


def init_actor_params(key):
    params = []
    for i in range(SUB_ACTION_COUNT):
        k = jax.random.fold_in(key, i)
        k1, k2, k3 = jax.random.split(k, 3)
        w1, b1 = _init_linear(k1, INPUT_SHAPE, HIDDEN)
        w2, b2 = _init_linear(k2, HIDDEN, HIDDEN)
        w3, b3 = _init_linear(k3, HIDDEN, SUB_ACTION_SIZE)
        # Output head transposed + zero-padded to A_PAD rows so the kernel emits
        # mean^T with batch on lanes; padded rows give tanh(0)=0 and are sliced off.
        w3t = jnp.zeros((A_PAD, HIDDEN), jnp.float32).at[:SUB_ACTION_SIZE, :].set(w3.T)
        b3t = jnp.zeros((A_PAD, 1), jnp.float32).at[:SUB_ACTION_SIZE, 0].set(b3[0])
        params.append(dict(w1=w1, b1=b1, w2=w2, b2=b2,
                           w3=w3, b3=b3, w3t=w3t, b3t=b3t))
    actor_logstd = jnp.zeros((OUTPUT_SHAPE,), jnp.float32)  # nn.Parameter(zeros)
    return params, actor_logstd


# ---------------------------- reference -------------------------------
def actor_forward_ref(x, params, actor_logstd, module_index,
                      output_max=OUTPUT_MAX_VALUE):
    p = params[module_index]
    h = jnp.tanh(x @ p["w1"] + p["b1"])
    h = jnp.tanh(h @ p["w2"] + p["b2"])
    out = h @ p["w3"] + p["b3"]
    mean = output_max * jnp.tanh(out)
    A = SUB_ACTION_SIZE
    std = jnp.exp(actor_logstd[module_index * A:(module_index + 1) * A])
    std = jnp.broadcast_to(std[None, :], (x.shape[0], A))
    return mean, std


# ------------------------------ main -----------------------------------
if __name__ == "__main__":
    key = jax.random.PRNGKey(0)
    k_params, k_x1, k_x2 = jax.random.split(key, 3)

    params, actor_logstd = init_actor_params(k_params)
    module_index = 1  # static, selects which sub-network's params are used

    # --- small batch: exercises the no-grid single-tile path ---
    B_small = 4
    x_small = jax.random.normal(k_x1, (B_small, INPUT_SHAPE), jnp.float32)
    mean_s, std_s = actor_forward(x_small, params, actor_logstd, module_index)
    mean_s = jax.block_until_ready(mean_s)
    std_s = jax.block_until_ready(std_s)
    mean_s_ref, std_s_ref = actor_forward_ref(x_small, params, actor_logstd,
                                              module_index)
    assert mean_s.shape == (B_small, SUB_ACTION_SIZE)
    assert std_s.shape == (B_small, SUB_ACTION_SIZE)
    assert jnp.allclose(mean_s, mean_s_ref, atol=1e-5, rtol=1e-5)
    assert jnp.allclose(std_s, std_s_ref, atol=1e-6, rtol=1e-6)

    # --- larger batch: exercises the tiled (2-tile, "parallel") grid path ---
    B_large = 300
    x_large = jax.random.normal(k_x2, (B_large, INPUT_SHAPE), jnp.float32)
    mean_l, std_l = actor_forward(x_large, params, actor_logstd, module_index)
    mean_l = jax.block_until_ready(mean_l)
    std_l = jax.block_until_ready(std_l)
    mean_l_ref, std_l_ref = actor_forward_ref(x_large, params, actor_logstd,
                                              module_index)
    assert mean_l.shape == (B_large, SUB_ACTION_SIZE)
    assert std_l.shape == (B_large, SUB_ACTION_SIZE)
    assert jnp.allclose(mean_l, mean_l_ref, atol=1e-5, rtol=1e-5)
    assert jnp.allclose(std_l, std_l_ref, atol=1e-6, rtol=1e-6)

    print("KERNEL_OK")
</pallas_src>

<mosaic_0001>
module attributes {stable_mosaic.version = 11 : i64} {
  func.func @_actor_kernel(%arg0: memref<8x32xf32, #tpu.memory_space<vmem>>, %arg1: memref<32x128xf32, #tpu.memory_space<vmem>>, %arg2: memref<1x128xf32, #tpu.memory_space<vmem>>, %arg3: memref<128x128xf32, #tpu.memory_space<vmem>>, %arg4: memref<1x128xf32, #tpu.memory_space<vmem>>, %arg5: memref<8x128xf32, #tpu.memory_space<vmem>>, %arg6: memref<8x1xf32, #tpu.memory_space<vmem>>, %arg7: memref<8x8xf32, #tpu.memory_space<vmem>>) attributes {dimension_semantics = [], scalar_prefetch = 0 : i64, scratch_operands = 0 : i64, tpu.core_type = #tpu.core_type<tc>} {
    %c0 = arith.constant 0 : index
    %c0_0 = arith.constant 0 : index
    %0 = vector.load %arg0[%c0, %c0_0] : memref<8x32xf32, #tpu.memory_space<vmem>>, vector<8x32xf32>
    %c0_1 = arith.constant 0 : index
    %c0_2 = arith.constant 0 : index
    %1 = vector.load %arg1[%c0_1, %c0_2] : memref<32x128xf32, #tpu.memory_space<vmem>>, vector<32x128xf32>
    %cst = arith.constant dense<0.000000e+00> : vector<8x128xf32>
    %2 = tpu.matmul %0, %1, %cst {dimension_numbers = #tpu.dot_dimension_numbers<[1], [0], [0], [1], [0, 0, 1, 1], [], []>} : vector<8x32xf32>, vector<32x128xf32>, vector<8x128xf32> -> vector<8x128xf32>
    %c0_3 = arith.constant 0 : index
    %c0_4 = arith.constant 0 : index
    %3 = vector.load %arg2[%c0_3, %c0_4] : memref<1x128xf32, #tpu.memory_space<vmem>>, vector<1x128xf32>
    %4 = vector.broadcast %3 : vector<1x128xf32> to vector<8x128xf32>
    %5 = arith.addf %2, %4 : vector<8x128xf32>
    %6 = math.tanh %5 : vector<8x128xf32>
    %c0_5 = arith.constant 0 : index
    %c0_6 = arith.constant 0 : index
    %7 = vector.load %arg3[%c0_5, %c0_6] : memref<128x128xf32, #tpu.memory_space<vmem>>, vector<128x128xf32>
    %cst_7 = arith.constant dense<0.000000e+00> : vector<8x128xf32>
    %8 = tpu.matmul %6, %7, %cst_7 {dimension_numbers = #tpu.dot_dimension_numbers<[1], [0], [0], [1], [0, 0, 1, 1], [], []>} : vector<8x128xf32>, vector<128x128xf32>, vector<8x128xf32> -> vector<8x128xf32>
    %c0_8 = arith.constant 0 : index
    %c0_9 = arith.constant 0 : index
    %9 = vector.load %arg4[%c0_8, %c0_9] : memref<1x128xf32, #tpu.memory_space<vmem>>, vector<1x128xf32>
    %10 = vector.broadcast %9 : vector<1x128xf32> to vector<8x128xf32>
    %11 = arith.addf %8, %10 : vector<8x128xf32>
    %12 = math.tanh %11 : vector<8x128xf32>
    %c0_10 = arith.constant 0 : index
    %c0_11 = arith.constant 0 : index
    %13 = vector.load %arg5[%c0_10, %c0_11] : memref<8x128xf32, #tpu.memory_space<vmem>>, vector<8x128xf32>
    %cst_12 = arith.constant dense<0.000000e+00> : vector<8x8xf32>
    %14 = tpu.matmul %13, %12, %cst_12 {dimension_numbers = #tpu.dot_dimension_numbers<[1], [1], [0], [0], [0, 0, 1, 0], [], []>} : vector<8x128xf32>, vector<8x128xf32>, vector<8x8xf32> -> vector<8x8xf32>
    %c0_13 = arith.constant 0 : index
    %c0_14 = arith.constant 0 : index
    %15 = vector.load %arg6[%c0_13, %c0_14] : memref<8x1xf32, #tpu.memory_space<vmem>>, vector<8x1xf32>
    %16 = vector.broadcast %15 : vector<8x1xf32> to vector<8x8xf32>
    %17 = arith.addf %14, %16 : vector<8x8xf32>
    %18 = math.tanh %17 : vector<8x8xf32>
    %cst_15 = arith.constant 2.000000e+00 : f32
    %19 = vector.broadcast %cst_15 : f32 to vector<8x8xf32>
    %20 = arith.mulf %19, %18 : vector<8x8xf32>
    %c0_16 = arith.constant 0 : index
    %c0_17 = arith.constant 0 : index
    %21 = vector.load %arg7[%c0_16, %c0_17] : memref<8x8xf32, #tpu.memory_space<vmem>>, vector<8x8xf32>
    tpu.vector_store %arg7[%c0_16, %c0_17], %20 {strides = array<i32>} : memref<8x8xf32, #tpu.memory_space<vmem>>, vector<8x8xf32>,
    return
  }
}

</mosaic_0001>

<llo_original>
// kernel: tpu_custom_call.1
$region0: #{tpu_custom_call.1}
  #allocation0 [shape = 'u32[]', space=smem, size = 0x4, offset = 0x4, fixed_abs, tag = 'smem constant byte address 0x4 - core index']
  #allocation1 [shape = 'u32[144,128]{1,0:T(1,128)}', space=vmem, size = 0x12000, scoped, tag = 'internal scratch']
  %s0 = inlined_call_operand.vmem [shape: f32[8,32], index: 0, kind: input, shape index: {}]
  %s1 = inlined_call_operand.hbm [shape: f32[32,128], index: 1, kind: input, shape index: {}]
  %s2 = inlined_call_operand.hbm [shape: f32[1,128], index: 2, kind: input, shape index: {}]
  %s3 = inlined_call_operand.hbm [shape: f32[128,128], index: 3, kind: input, shape index: {}]
  %s4 = inlined_call_operand.hbm [shape: f32[1,128], index: 4, kind: input, shape index: {}]
  %s5 = inlined_call_operand.vmem [shape: f32[8,128], index: 5, kind: input, shape index: {}]
  %s6 = inlined_call_operand.vmem [shape: f32[8,1], index: 6, kind: input, shape index: {}]
  %s7 = inlined_call_operand.hbm [shape: f32[8,8], index: 7, kind: output, shape index: {}]
  %s8 = sld [smem:[#allocation0]]
  $region54: #{tpu_custom_call.1} parent=0
    _
  %s10 = ssub.s32 1, %s8
  %s11 = scalar_select 0, %s10, %s8
  $region1: #{tpu_custom_call.1} parent=0
    #allocation2 [shape = 'u8[16384]{0}', space=vmem, size = 0x4000, scoped, tag = 'input window, operand 1, single buffered']
    #allocation3 [shape = 's32[1]{0}', space=sflag, size = 0x4, scoped, tag = 'scoped memory for tpu_custom_call.1']
    #allocation4 [shape = 's32[1]{0}', space=sflag, size = 0x4, scoped, tag = 'scoped memory for tpu_custom_call.1']
    #allocation5 [shape = 'u8[512]{0}', space=vmem, size = 0x400, scoped, tag = 'input window, operand 2, single buffered']
    #allocation6 [shape = 's32[1]{0}', space=sflag, size = 0x4, scoped, tag = 'scoped memory for tpu_custom_call.1']
    #allocation7 [shape = 'u8[65536]{0}', space=vmem, size = 0x10000, scoped, tag = 'input window, operand 3, single buffered']
    #allocation8 [shape = 'u8[512]{0}', space=vmem, size = 0x400, scoped, tag = 'input window, operand 4, single buffered']
    #allocation9 [shape = 's32[1]{0}', space=sflag, size = 0x4, scoped, tag = 'scoped memory for tpu_custom_call.1']
    #allocation10 [shape = 'u8[4096]{0}', space=vmem, size = 0x1000, scoped, tag = 'output window, operand 0, single buffered']
    %12 = vsyncpa [#allocation3], 0
    %13 = vsyncpa [#allocation6], 0
    %14 = vsyncpa [#allocation9], 0
    %15 = vsyncpa [#allocation4], 0
    // Predicated region
    $region2: #{tpu_custom_call.1} parent=1 // pred_check
      _
    $region3: #{tpu_custom_call.1} parent=1 // pred_check_branch
      %17 = sbr.rel (0) target = $region5
    $region4: #{tpu_custom_call.1} parent=1 // pred_region
      _
    $region5: #{tpu_custom_call.1} parent=1 // pred_fallthru
      _
    // Predicated region
    $region6: #{tpu_custom_call.1} parent=1 // pred_check
      _
    $region7: #{tpu_custom_call.1} parent=1 // pred_check_branch
      %19 = sbr.rel (0) target = $region9
    $region8: #{tpu_custom_call.1} parent=1 // pred_region
      %s21 = ssub.s32 512, 512
      %22 = vsyncadd [#allocation3], %s21
      %s23 = sshll.u32 [#allocation2], 4
      %s24 = int_to_ptr.vmem [resolvable:$true] %s23
      %29 = dma.hbm_to_vmem [thread:$0]  %s1, 512, %s24, [#allocation3], 128, 128, 8
    $region9: #{tpu_custom_call.1} parent=1 // pred_fallthru
      _
    // Predicated region
    $region10: #{tpu_custom_call.1} parent=1 // pred_check
      _
    $region11: #{tpu_custom_call.1} parent=1 // pred_check_branch
      %31 = sbr.rel (0) target = $region13
    $region12: #{tpu_custom_call.1} parent=1 // pred_region
      %s33 = ssub.s32 16, 16
      %34 = vsyncadd [#allocation6], %s33
      %s36 = sshll.u32 [#allocation5], 4
      %s37 = int_to_ptr.vmem [resolvable:$true] %s36
      %39 = dma.hbm_to_vmem [thread:$0]  %s2, 16, %s37, [#allocation6]
    $region13: #{tpu_custom_call.1} parent=1 // pred_fallthru
      _
    // Predicated region
    $region14: #{tpu_custom_call.1} parent=1 // pred_check
      _
    $region15: #{tpu_custom_call.1} parent=1 // pred_check_branch
      %41 = sbr.rel (0) target = $region17
    $region16: #{tpu_custom_call.1} parent=1 // pred_region
      %s43 = ssub.s32 2048, 2048
      %44 = vsyncadd [#allocation6], %s43
      %s45 = sshll.u32 [#allocation7], 4
      %s46 = int_to_ptr.vmem [resolvable:$true] %s45
      %51 = dma.hbm_to_vmem [thread:$0]  %s3, 2048, %s46, [#allocation6], 128, 128, 8
    $region17: #{tpu_custom_call.1} parent=1 // pred_fallthru
      _
    // Predicated region
    $region18: #{tpu_custom_call.1} parent=1 // pred_check
      _
    $region19: #{tpu_custom_call.1} parent=1 // pred_check_branch
      %53 = sbr.rel (0) target = $region21
    $region20: #{tpu_custom_call.1} parent=1 // pred_region
      %s55 = ssub.s32 16, 16
      %56 = vsyncadd [#allocation9], %s55
      %s58 = sshll.u32 [#allocation8], 4
      %s59 = int_to_ptr.vmem [resolvable:$true] %s58
      %61 = dma.hbm_to_vmem [thread:$0]  %s4, 16, %s59, [#allocation9]
    $region21: #{tpu_custom_call.1} parent=1 // pred_fallthru
      _
    // Predicated region
    $region22: #{tpu_custom_call.1} parent=1 // pred_check
      _
    $region23: #{tpu_custom_call.1} parent=1 // pred_check_branch
      %63 = sbr.rel (0) target = $region25
    $region24: #{tpu_custom_call.1} parent=1 // pred_region
      _
    $region25: #{tpu_custom_call.1} parent=1 // pred_fallthru
      _
    // Predicated region
    $region26: #{tpu_custom_call.1} parent=1 // pred_check
      _
    $region27: #{tpu_custom_call.1} parent=1 // pred_check_branch
      %65 = sbr.rel (0) target = $region29
    $region28: #{tpu_custom_call.1} parent=1 // pred_region
      _
    $region29: #{tpu_custom_call.1} parent=1 // pred_fallthru
      _
    // Predicated region
    $region30: #{tpu_custom_call.1} parent=1 // pred_check
      _
    $region31: #{tpu_custom_call.1} parent=1 // pred_check_branch
      %67 = sbr.rel (0) target = $region33
    $region32: #{tpu_custom_call.1} parent=1 // pred_region
      %68 = dma.done [#allocation3], 512
    $region33: #{tpu_custom_call.1} parent=1 // pred_fallthru
      _
    // Predicated region
    $region34: #{tpu_custom_call.1} parent=1 // pred_check
      _
    $region35: #{tpu_custom_call.1} parent=1 // pred_check_branch
      %70 = sbr.rel (0) target = $region37
    $region36: #{tpu_custom_call.1} parent=1 // pred_region
      %71 = dma.done [#allocation6], 16
    $region37: #{tpu_custom_call.1} parent=1 // pred_fallthru
      _
    // Predicated region
    $region38: #{tpu_custom_call.1} parent=1 // pred_check
      _
    $region39: #{tpu_custom_call.1} parent=1 // pred_check_branch
      %73 = sbr.rel (0) target = $region41
    $region40: #{tpu_custom_call.1} parent=1 // pred_region
      %74 = dma.done [#allocation6], 2048
    $region41: #{tpu_custom_call.1} parent=1 // pred_fallthru
      _
    // Predicated region
    $region42: #{tpu_custom_call.1} parent=1 // pred_check
      _
    $region43: #{tpu_custom_call.1} parent=1 // pred_check_branch
      %76 = sbr.rel (0) target = $region45
    $region44: #{tpu_custom_call.1} parent=1 // pred_region
      %77 = dma.done [#allocation9], 16
    $region45: #{tpu_custom_call.1} parent=1 // pred_fallthru
      _
    %v78 = vld [vmem:[%s0] sm:$0xff]
    %v79 = vld [vmem:[#allocation2] sm:$0xff]
    %v80 = vld [vmem:[#allocation2 + $0x8] sm:$0xff]
    %v81 = vld [vmem:[#allocation2 + $0x10] sm:$0xff]
    %v82 = vld [vmem:[#allocation2 + $0x18] sm:$0xff]
    %v83 = vld [vmem:[#allocation5] sm:$0x1]
    %v85 = vlaneseq
    %v86 = vshrl.u32 %v85, 7
    %v87 = vsub.s32 0, %v86
    %v88 = vrot.slane %v83, %v87
    %vm90 = vcmask 261120
    %v92 = vsel %vm90, %v78, 0
    %94 = vmatprep.subr.mxu0 0.0
    %95 = vmatpush1.msra.mxu0 0.0
    %96 = vmatprep.subr.mxu0 0.0
    %97 = vmatpush1.msra.mxu0 0.0
    %98 = vmatprep.subr.mxu0 0.0
    %99 = vmatpush1.msra.mxu0 0.0
    %100 = vmatprep.subr.mxu0 0.0
    %101 = vmatpush1.msra.mxu0 0.0
    %102 = vmatprep.subr.mxu0 0.0
    %103 = vmatpush1.msra.mxu0 0.0
    %104 = vmatprep.subr.mxu0 0.0
    %105 = vmatpush1.msra.mxu0 0.0
    %106 = vmatprep.subr.mxu0 0.0
    %107 = vmatpush1.msra.mxu0 0.0
    %108 = vmatprep.subr.mxu0 0.0
    %109 = vmatpush1.msra.mxu0 0.0
    %110 = vmatprep.subr.mxu0 0.0
    %111 = vmatpush1.msra.mxu0 0.0
    %112 = vmatprep.subr.mxu0 0.0
    %113 = vmatpush1.msra.mxu0 0.0
    %114 = vmatprep.subr.mxu0 0.0
    %115 = vmatpush1.msra.mxu0 0.0
    %116 = vmatprep.subr.mxu0 0.0
    %117 = vmatpush1.msra.mxu0 0.0
    %118 = vmatprep.subr.mxu0 0.0
    %119 = vmatpush1.msra.mxu0 %v82
    %120 = vmatprep.subr.mxu0 0.0
    %121 = vmatpush1.msra.mxu0 %v81
    %122 = vmatprep.subr.mxu0 0.0
    %123 = vmatpush1.msra.mxu0 %v80
    %124 = vmatprep.subr.mxu0 0.0
    %125 = vmatpush1.msra.mxu0 %v79
    %126 = vmatprep.subr.mxu0 0.0
    %127 = vmatpush2.msra.mxu0 0.0
    %128 = vmatprep.subr.mxu0 0.0
    %129 = vmatpush2.msra.mxu0 0.0
    %130 = vmatprep.subr.mxu0 0.0
    %131 = vmatpush2.msra.mxu0 0.0
    %132 = vmatprep.subr.mxu0 0.0
    %133 = vmatpush2.msra.mxu0 0.0
    %134 = vmatprep.subr.mxu0 0.0
    %135 = vmatpush2.msra.mxu0 0.0
    %136 = vmatprep.subr.mxu0 0.0
    %137 = vmatpush2.msra.mxu0 0.0
    %138 = vmatprep.subr.mxu0 0.0
    %139 = vmatpush2.msra.mxu0 0.0
    %140 = vmatprep.subr.mxu0 0.0
    %141 = vmatpush2.msra.mxu0 0.0
    %142 = vmatprep.subr.mxu0 0.0
    %143 = vmatpush2.msra.mxu0 0.0
    %144 = vmatprep.subr.mxu0 0.0
    %145 = vmatpush2.msra.mxu0 0.0
    %146 = vmatprep.subr.mxu0 0.0
    %147 = vmatpush2.msra.mxu0 0.0
    %148 = vmatprep.subr.mxu0 0.0
    %149 = vmatpush2.msra.mxu0 0.0
    %150 = vmatprep.subr.mxu0 0.0
    %151 = vmatpush2.msra.mxu0 0.0
    %152 = vmatprep.subr.mxu0 0.0
    %153 = vmatpush2.msra.mxu0 0.0
    %154 = vmatprep.subr.mxu0 0.0
    %155 = vmatpush2.msra.mxu0 0.0
    %156 = vmatprep.subr.mxu0 0.0
    %157 = vmatpush2.msra.mxu0 0.0
    %158 = vmatprep.mubr.f32.mxu0 0.0
    %159 = vmatmul.mubr.f32.gmra.mxu0 %v92
    %v160 = vpop.f32.mrf.mxu0
    %v161 = vadd.f32 %v88, %v160
    %v162 = vpop.f32.mrf.mxu0
    %163 = vdwg.mxu0
    %v164 = vtanh.pop %v161
    %v165 = vld [vmem:[#allocation7] sm:$0xff]
    %v166 = vld [vmem:[#allocation7 + $0x8] sm:$0xff]
    %v167 = vld [vmem:[#allocation7 + $0x10] sm:$0xff]
    %v168 = vld [vmem:[#allocation7 + $0x18] sm:$0xff]
    %v169 = vld [vmem:[#allocation7 + $0x20] sm:$0xff]
    %v170 = vld [vmem:[#allocation7 + $0x28] sm:$0xff]
    %v171 = vld [vmem:[#allocation7 + $0x30] sm:$0xff]
    %v172 = vld [vmem:[#allocation7 + $0x38] sm:$0xff]
    %v173 = vld [vmem:[#allocation7 + $0x40] sm:$0xff]
    %v174 = vld [vmem:[#allocation7 + $0x48] sm:$0xff]
    %v175 = vld [vmem:[#allocation7 + $0x50] sm:$0xff]
    %v176 = vld [vmem:[#allocation7 + $0x58] sm:$0xff]
    %v177 = vld [vmem:[#allocation7 + $0x60] sm:$0xff]
    %v178 = vld [vmem:[#allocation7 + $0x68] sm:$0xff]
    %v179 = vld [vmem:[#allocation7 + $0x70] sm:$0xff]
    %v180 = vld [vmem:[#allocation7 + $0x78] sm:$0xff]
    %v181 = vld [vmem:[#allocation8] sm:$0x1]
    %v183 = vlaneseq
    %v184 = vshrl.u32 %v183, 7
    %v185 = vsub.s32 0, %v184
    %v186 = vrot.slane %v181, %v185
    %188 = vmatprep.subr.mxu0 0.0
    %189 = vmatpush1.msra.mxu0 %v180
    %190 = vmatprep.subr.mxu0 0.0
    %191 = vmatpush1.msra.mxu0 %v179
    %192 = vmatprep.subr.mxu0 0.0
    %193 = vmatpush1.msra.mxu0 %v178
    %194 = vmatprep.subr.mxu0 0.0
    %195 = vmatpush1.msra.mxu0 %v177
    %196 = vmatprep.subr.mxu0 0.0
    %197 = vmatpush1.msra.mxu0 %v176
    %198 = vmatprep.subr.mxu0 0.0
    %199 = vmatpush1.msra.mxu0 %v175
    %200 = vmatprep.subr.mxu0 0.0
    %201 = vmatpush1.msra.mxu0 %v174
    %202 = vmatprep.subr.mxu0 0.0
    %203 = vmatpush1.msra.mxu0 %v173
    %204 = vmatprep.subr.mxu0 0.0
    %205 = vmatpush1.msra.mxu0 %v172
    %206 = vmatprep.subr.mxu0 0.0
    %207 = vmatpush1.msra.mxu0 %v171
    %208 = vmatprep.subr.mxu0 0.0
    %209 = vmatpush1.msra.mxu0 %v170
    %210 = vmatprep.subr.mxu0 0.0
    %211 = vmatpush1.msra.mxu0 %v169
    %212 = vmatprep.subr.mxu0 0.0
    %213 = vmatpush1.msra.mxu0 %v168
    %214 = vmatprep.subr.mxu0 0.0
    %215 = vmatpush1.msra.mxu0 %v167
    %216 = vmatprep.subr.mxu0 0.0
    %217 = vmatpush1.msra.mxu0 %v166
    %218 = vmatprep.subr.mxu0 0.0
    %219 = vmatpush1.msra.mxu0 %v165
    %220 = vmatprep.subr.mxu0 0.0
    %221 = vmatpush2.msra.mxu0 0.0
    %222 = vmatprep.subr.mxu0 0.0
    %223 = vmatpush2.msra.mxu0 0.0
    %224 = vmatprep.subr.mxu0 0.0
    %225 = vmatpush2.msra.mxu0 0.0
    %226 = vmatprep.subr.mxu0 0.0
    %227 = vmatpush2.msra.mxu0 0.0
    %228 = vmatprep.subr.mxu0 0.0
    %229 = vmatpush2.msra.mxu0 0.0
    %230 = vmatprep.subr.mxu0 0.0
    %231 = vmatpush2.msra.mxu0 0.0
    %232 = vmatprep.subr.mxu0 0.0
    %233 = vmatpush2.msra.mxu0 0.0
    %234 = vmatprep.subr.mxu0 0.0
    %235 = vmatpush2.msra.mxu0 0.0
    %236 = vmatprep.subr.mxu0 0.0
    %237 = vmatpush2.msra.mxu0 0.0
    %238 = vmatprep.subr.mxu0 0.0
    %239 = vmatpush2.msra.mxu0 0.0
    %240 = vmatprep.subr.mxu0 0.0
    %241 = vmatpush2.msra.mxu0 0.0
    %242 = vmatprep.subr.mxu0 0.0
    %243 = vmatpush2.msra.mxu0 0.0
    %244 = vmatprep.subr.mxu0 0.0
    %245 = vmatpush2.msra.mxu0 0.0
    %246 = vmatprep.subr.mxu0 0.0
    %247 = vmatpush2.msra.mxu0 0.0
    %248 = vmatprep.subr.mxu0 0.0
    %249 = vmatpush2.msra.mxu0 0.0
    %250 = vmatprep.subr.mxu0 0.0
    %251 = vmatpush2.msra.mxu0 0.0
    %252 = vmatprep.mubr.f32.mxu0 0.0
    %253 = vmatmul.mubr.f32.gmra.mxu0 %v164
    %v254 = vpop.f32.mrf.mxu0
    %v255 = vadd.f32 %v186, %v254
    %v256 = vpop.f32.mrf.mxu0
    %257 = vdwg.mxu0
    %v258 = vtanh.pop %v255
    %v259 = vld [vmem:[%s5] sm:$0xff]
    %v260 = vld [vmem:[%s6] sm:$0xff]
    %262 = vset.pattern.permute.xlu0 0
    %263 = vperm.xlu0 %262, %v260
    %v264 = vpop.permute.xlu0 %263
    %266 = vmatprep.subr.mxu0 0.0
    %267 = vmatpush1.xpose.msra.mxu0 0.0
    %268 = vmatprep.subr.mxu0 0.0
    %269 = vmatpush1.xpose.msra.mxu0 0.0
    %270 = vmatprep.subr.mxu0 0.0
    %271 = vmatpush1.xpose.msra.mxu0 0.0
    %272 = vmatprep.subr.mxu0 0.0
    %273 = vmatpush1.xpose.msra.mxu0 0.0
    %274 = vmatprep.subr.mxu0 0.0
    %275 = vmatpush1.xpose.msra.mxu0 0.0
    %276 = vmatprep.subr.mxu0 0.0
    %277 = vmatpush1.xpose.msra.mxu0 0.0
    %278 = vmatprep.subr.mxu0 0.0
    %279 = vmatpush1.xpose.msra.mxu0 0.0
    %280 = vmatprep.subr.mxu0 0.0
    %281 = vmatpush1.xpose.msra.mxu0 0.0
    %282 = vmatprep.subr.mxu0 0.0
    %283 = vmatpush1.xpose.msra.mxu0 0.0
    %284 = vmatprep.subr.mxu0 0.0
    %285 = vmatpush1.xpose.msra.mxu0 0.0
    %286 = vmatprep.subr.mxu0 0.0
    %287 = vmatpush1.xpose.msra.mxu0 0.0
    %288 = vmatprep.subr.mxu0 0.0
    %289 = vmatpush1.xpose.msra.mxu0 0.0
    %290 = vmatprep.subr.mxu0 0.0
    %291 = vmatpush1.xpose.msra.mxu0 0.0
    %292 = vmatprep.subr.mxu0 0.0
    %293 = vmatpush1.xpose.msra.mxu0 0.0
    %294 = vmatprep.subr.mxu0 0.0
    %295 = vmatpush1.xpose.msra.mxu0 0.0
    %296 = vmatprep.subr.mxu0 0.0
    %297 = vmatpush1.xpose.msra.mxu0 %v258
    %298 = vmatprep.subr.mxu0 0.0
    %299 = vmatpush2.xpose.msra.mxu0 0.0
    %300 = vmatprep.subr.mxu0 0.0
    %301 = vmatpush2.xpose.msra.mxu0 0.0
    %302 = vmatprep.subr.mxu0 0.0
    %303 = vmatpush2.xpose.msra.mxu0 0.0
    %304 = vmatprep.subr.mxu0 0.0
    %305 = vmatpush2.xpose.msra.mxu0 0.0
    %306 = vmatprep.subr.mxu0 0.0
    %307 = vmatpush2.xpose.msra.mxu0 0.0
    %308 = vmatprep.subr.mxu0 0.0
    %309 = vmatpush2.xpose.msra.mxu0 0.0
    %310 = vmatprep.subr.mxu0 0.0
    %311 = vmatpush2.xpose.msra.mxu0 0.0
    %312 = vmatprep.subr.mxu0 0.0
    %313 = vmatpush2.xpose.msra.mxu0 0.0
    %314 = vmatprep.subr.mxu0 0.0
    %315 = vmatpush2.xpose.msra.mxu0 0.0
    %316 = vmatprep.subr.mxu0 0.0
    %317 = vmatpush2.xpose.msra.mxu0 0.0
    %318 = vmatprep.subr.mxu0 0.0
    %319 = vmatpush2.xpose.msra.mxu0 0.0
    %320 = vmatprep.subr.mxu0 0.0
    %321 = vmatpush2.xpose.msra.mxu0 0.0
    %322 = vmatprep.subr.mxu0 0.0
    %323 = vmatpush2.xpose.msra.mxu0 0.0
    %324 = vmatprep.subr.mxu0 0.0
    %325 = vmatpush2.xpose.msra.mxu0 0.0
    %326 = vmatprep.subr.mxu0 0.0
    %327 = vmatpush2.xpose.msra.mxu0 0.0
    %328 = vmatprep.subr.mxu0 0.0
    %329 = vmatpush2.xpose.msra.mxu0 0.0
    %330 = vmatprep.mubr.f32.mxu0 0.0
    %331 = vmatmul.mubr.f32.gmra.mxu0 %v259
    %v332 = vpop.f32.mrf.mxu0
    %v333 = vadd.f32 %v264, %v332
    %v334 = vpop.f32.mrf.mxu0
    %335 = vdwg.mxu0
    %v336 = vtanh.pop %v333
    %v337 = vmul.f32 %v336, 2.0
    %vm338 = vcmask 64512
    %339 = vst.msk [vmem:[#allocation10] sm:$0xff] %vm338, %v337
    // Predicated region
    $region46: #{tpu_custom_call.1} parent=1 // pred_check
      _
    $region47: #{tpu_custom_call.1} parent=1 // pred_check_branch
      %341 = sbr.rel (0) target = $region49
    $region48: #{tpu_custom_call.1} parent=1 // pred_region
      %s343 = ssub.s32 128, 128
      %344 = vsyncadd [#allocation4], %s343
      %s346 = sshll.u32 [#allocation10], 4
      %s347 = int_to_ptr.vmem [resolvable:$true] %s346
      %349 = dma.vmem_to_hbm [thread:$0]  %s347, 128, %s7, [#allocation4]
    $region49: #{tpu_custom_call.1} parent=1 // pred_fallthru
      _
    // Predicated region
    $region50: #{tpu_custom_call.1} parent=1 // pred_check
      _
    $region51: #{tpu_custom_call.1} parent=1 // pred_check_branch
      %351 = sbr.rel (0) target = $region53
    $region52: #{tpu_custom_call.1} parent=1 // pred_region
      %352 = dma.done [#allocation4], 128
    $region53: #{tpu_custom_call.1} parent=1 // pred_fallthru
      _
    %353 = vsyncpa [#allocation3], 1
    %354 = vsyncpa [#allocation6], 1
    %355 = vsyncpa [#allocation9], 1
    %356 = vsyncpa [#allocation4], 1

</llo_original>
